<compile_context>
chip_gen: v6e
topology: v6e:2x2x1
jax: 0.10.0
libtpu: 0.0.40
codegen_flags: <defaults>
</compile_context>

<pallas_src>
import jax
import jax.numpy as jnp
from jax.experimental import pallas as pl
from jax.experimental.pallas import tpu as pltpu


def attention_kernel(value_ref, key_ref, w1k_ref, w1v_ref, b1_ref,
                     w2_ref, w3_ref, b3_ref, out_ref):
    v = value_ref[...]                       # (TB, L, D) f32
    k = key_ref[...]                         # (TB, D)    f32
    TB, L, D = v.shape
    cdt = w1k_ref.dtype                      # MXU compute dtype (f32 or bf16)

    # Linear(2D->D) split: concat([key, value]) @ W1 == key @ W1[:D] + value @ W1[D:].
    # Key half computed ONCE per batch row (no redundant L-broadcast matmul).
    kh = jnp.dot(k.astype(cdt), w1k_ref[...],
                 preferred_element_type=jnp.float32)           # (TB, D)

    # Value half as one flat 2-D matmul: (TB*L, D) @ (D, D).
    vh = jnp.dot(v.reshape(TB * L, D).astype(cdt), w1v_ref[...],
                 preferred_element_type=jnp.float32)           # (TB*L, D)

    h = vh.reshape(TB, L, D) + kh[:, None, :] + b1_ref[...]    # b1 is (1, D)
    h = jnp.maximum(h, 0.0)                                    # ReLU (VPU)

    # Linear(D->1) scoring on the VPU + lane reduce (XLU). The scalar bias b2
    # is dropped: adding a constant before softmax is a mathematical no-op.
    scores = jnp.sum(h * w2_ref[...], axis=-1)                 # (TB, L)

    # Softmax over L (f32); approx reciprocal lowers to the EUP slot.
    m = jnp.max(scores, axis=-1, keepdims=True)
    e = jnp.exp(scores - m)
    p = e * pl.reciprocal(jnp.sum(e, axis=-1, keepdims=True), approx=True)

    # Weighted pooling on the VPU (L is small): sum_L value * weight.
    pooled = jnp.sum(v * p[:, :, None], axis=1)                # (TB, D) f32

    # fc: Linear(D->O) + ReLU.
    out = jnp.dot(pooled.astype(cdt), w3_ref[...],
                  preferred_element_type=jnp.float32) + b3_ref[...]
    out_ref[...] = jnp.maximum(out, 0.0).astype(out_ref.dtype)


def _pick_block_b(B, L, D):
    # Keep the double-buffered f32 value tile around ~4 MiB so the working set
    # stays well inside the smallest scoped-VMEM budget across generations
    # (v7x has only 64 MiB physical VMEM); prefer sublane-friendly multiples of 8.
    cap = max(1, (4 << 20) // (L * D * 4))
    divs = [d for d in range(1, B + 1) if B % d == 0 and d <= cap]
    mult8 = [d for d in divs if d % 8 == 0]
    return max(mult8) if mult8 else max(divs)


def attention_forward(value, key, params, *, block_b=None,
                      compute_dtype=jnp.float32):
    B, L, D = value.shape
    O = params["w3"].shape[1]

    if block_b is None:
        block_b = _pick_block_b(B, L, D)
    assert B % block_b == 0, "batch must be divisible by the batch tile"
    grid = (B // block_b,)

    # Matmul weights optionally cast (bf16 on v6e/v7x); biases and the D->1
    # scoring row stay f32 (used on the VPU / as f32 adds).
    # NOTE: for production-scale D/O one would zero-pad the feature/output
    # dims to multiples of 128 lanes to avoid masked partial stores.
    w1k = params["w1k"].astype(compute_dtype)
    w1v = params["w1v"].astype(compute_dtype)
    w3 = params["w3"].astype(compute_dtype)
    b1 = params["b1"].astype(jnp.float32)
    w2 = params["w2"].astype(jnp.float32)
    b3 = params["b3"].astype(jnp.float32)

    def resident(shape):
        # Whole array as one block with a constant index_map: stays resident
        # in VMEM across grid steps (no re-DMA per batch tile).
        return pl.BlockSpec(shape, lambda i, _n=len(shape): (0,) * _n)

    in_specs = [
        pl.BlockSpec((block_b, L, D), lambda i: (i, 0, 0)),    # value (streamed)
        pl.BlockSpec((block_b, D), lambda i: (i, 0)),          # key   (streamed)
        resident(w1k.shape), resident(w1v.shape), resident(b1.shape),
        resident(w2.shape), resident(w3.shape), resident(b3.shape),
    ]
    out_specs = pl.BlockSpec((block_b, O), lambda i: (i, 0))

    return pl.pallas_call(
        attention_kernel,
        out_shape=jax.ShapeDtypeStruct((B, O), jnp.float32),
        grid=grid,
        in_specs=in_specs,
        out_specs=out_specs,
        compiler_params=pltpu.CompilerParams(
            dimension_semantics=("parallel",)),   # batch tiles are independent
    )(value, key, w1k, w1v, b1, w2, w3, b3)


def reference_forward(value, key, params):
    """Pure-JAX reference mirroring the PyTorch forward (keeps the b2 bias)."""
    B, L, D = value.shape
    kb = jnp.broadcast_to(key[:, None, :], (B, L, D))
    cat = jnp.concatenate([kb, value], axis=-1)                       # (B, L, 2D)
    w1 = jnp.concatenate([params["w1k"], params["w1v"]], axis=0)      # (2D, D)
    h = jax.nn.relu(cat @ w1 + params["b1"][0])
    scores = jnp.einsum('bld,d->bl', h, params["w2"][0]) + params["b2"][0, 0]
    w = jax.nn.softmax(scores, axis=-1)[..., None]
    pooled = (value * w).sum(axis=1)
    return jax.nn.relu(pooled @ params["w3"] + params["b3"][0])


def init_params(key, in_dim, out_dim):
    """Deterministic init; Linear weights stored transposed as (in, out)."""
    ks = jax.random.split(key, 7)
    scale = 0.1
    return {
        "w1k": scale * jax.random.normal(ks[0], (in_dim, in_dim), jnp.float32),
        "w1v": scale * jax.random.normal(ks[1], (in_dim, in_dim), jnp.float32),
        "b1":  scale * jax.random.normal(ks[2], (1, in_dim), jnp.float32),
        "w2":  scale * jax.random.normal(ks[3], (1, in_dim), jnp.float32),
        "b2":  scale * jax.random.normal(ks[4], (1, 1), jnp.float32),
        "w3":  scale * jax.random.normal(ks[5], (in_dim, out_dim), jnp.float32),
        "b3":  scale * jax.random.normal(ks[6], (1, out_dim), jnp.float32),
    }


if __name__ == "__main__":
    B, L, in_dim, out_dim = 16, 8, 32, 16

    root = jax.random.PRNGKey(0)
    k_val, k_key, k_par = jax.random.split(root, 3)
    value = jax.random.normal(k_val, (B, L, in_dim), jnp.float32)
    key_in = jax.random.normal(k_key, (B, in_dim), jnp.float32)
    params = init_params(k_par, in_dim, out_dim)

    # block_b=8 -> grid=(2,): exercises the pipelined, "parallel" batch axis.
    out = attention_forward(value, key_in, params, block_b=8)
    out = jax.block_until_ready(out)

    ref = reference_forward(value, key_in, params)
    assert out.shape == (B, out_dim)
    max_err = float(jnp.max(jnp.abs(out - ref)))
    # Tolerance slightly loosened vs 1e-5 for the approx (EUP) reciprocal.
    assert jnp.allclose(out, ref, atol=2e-3, rtol=2e-3), (max_err, out, ref)

    print("KERNEL_OK")
</pallas_src>

<mosaic_0001>
module attributes {stable_mosaic.version = 11 : i64} {
  func.func @attention_kernel(%arg0: i32, %arg1: memref<8x8x32xf32, #tpu.memory_space<vmem>>, %arg2: memref<8x32xf32, #tpu.memory_space<vmem>>, %arg3: memref<32x32xf32, #tpu.memory_space<vmem>>, %arg4: memref<32x32xf32, #tpu.memory_space<vmem>>, %arg5: memref<1x32xf32, #tpu.memory_space<vmem>>, %arg6: memref<1x32xf32, #tpu.memory_space<vmem>>, %arg7: memref<32x16xf32, #tpu.memory_space<vmem>>, %arg8: memref<1x16xf32, #tpu.memory_space<vmem>>, %arg9: memref<8x16xf32, #tpu.memory_space<vmem>>) attributes {dimension_semantics = [#tpu.dimension_semantics<parallel>], iteration_bounds = array<i64: 2>, scalar_prefetch = 0 : i64, scratch_operands = 0 : i64, tpu.core_type = #tpu.core_type<tc>, window_params = [{transform_indices = @transform_0, window_bounds = array<i64: 8, 8, 32>}, {transform_indices = @transform_1, window_bounds = array<i64: 8, 32>}, {pipeline_mode = #tpu.pipeline_mode<synchronous>, transform_indices = @transform_2, window_bounds = array<i64: 32, 32>}, {pipeline_mode = #tpu.pipeline_mode<synchronous>, transform_indices = @transform_3, window_bounds = array<i64: 32, 32>}, {pipeline_mode = #tpu.pipeline_mode<synchronous>, transform_indices = @transform_4, window_bounds = array<i64: 1, 32>}, {pipeline_mode = #tpu.pipeline_mode<synchronous>, transform_indices = @transform_5, window_bounds = array<i64: 1, 32>}, {pipeline_mode = #tpu.pipeline_mode<synchronous>, transform_indices = @transform_6, window_bounds = array<i64: 32, 16>}, {pipeline_mode = #tpu.pipeline_mode<synchronous>, transform_indices = @transform_7, window_bounds = array<i64: 1, 16>}, {transform_indices = @transform_8, window_bounds = array<i64: 8, 16>}]} {
    %c0 = arith.constant 0 : index
    %c0_0 = arith.constant 0 : index
    %c0_1 = arith.constant 0 : index
    %0 = vector.load %arg1[%c0, %c0_0, %c0_1] : memref<8x8x32xf32, #tpu.memory_space<vmem>>, vector<8x8x32xf32>
    %c0_2 = arith.constant 0 : index
    %c0_3 = arith.constant 0 : index
    %1 = vector.load %arg2[%c0_2, %c0_3] : memref<8x32xf32, #tpu.memory_space<vmem>>, vector<8x32xf32>
    %c0_4 = arith.constant 0 : index
    %c0_5 = arith.constant 0 : index
    %2 = vector.load %arg3[%c0_4, %c0_5] : memref<32x32xf32, #tpu.memory_space<vmem>>, vector<32x32xf32>
    %cst = arith.constant dense<0.000000e+00> : vector<8x32xf32>
    %3 = tpu.matmul %1, %2, %cst {dimension_numbers = #tpu.dot_dimension_numbers<[1], [0], [0], [1], [0, 0, 1, 1], [], []>} : vector<8x32xf32>, vector<32x32xf32>, vector<8x32xf32> -> vector<8x32xf32>
    %4 = vector.shape_cast %0 : vector<8x8x32xf32> to vector<64x32xf32>
    %c0_6 = arith.constant 0 : index
    %c0_7 = arith.constant 0 : index
    %5 = vector.load %arg4[%c0_6, %c0_7] : memref<32x32xf32, #tpu.memory_space<vmem>>, vector<32x32xf32>
    %cst_8 = arith.constant dense<0.000000e+00> : vector<64x32xf32>
    %6 = tpu.matmul %4, %5, %cst_8 {dimension_numbers = #tpu.dot_dimension_numbers<[1], [0], [0], [1], [0, 0, 1, 1], [], []>} : vector<64x32xf32>, vector<32x32xf32>, vector<64x32xf32> -> vector<64x32xf32>
    %7 = vector.shape_cast %6 : vector<64x32xf32> to vector<8x8x32xf32>
    %8 = vector.shape_cast %3 : vector<8x32xf32> to vector<8x1x32xf32>
    %9 = vector.broadcast %8 : vector<8x1x32xf32> to vector<8x8x32xf32>
    %10 = arith.addf %7, %9 : vector<8x8x32xf32>
    %c0_9 = arith.constant 0 : index
    %c0_10 = arith.constant 0 : index
    %11 = vector.load %arg5[%c0_9, %c0_10] : memref<1x32xf32, #tpu.memory_space<vmem>>, vector<1x32xf32>
    %12 = vector.shape_cast %11 : vector<1x32xf32> to vector<1x1x32xf32>
    %13 = vector.broadcast %12 : vector<1x1x32xf32> to vector<8x8x32xf32>
    %14 = arith.addf %10, %13 : vector<8x8x32xf32>
    %cst_11 = arith.constant 0.000000e+00 : f32
    %15 = vector.broadcast %cst_11 : f32 to vector<8x8x32xf32>
    %16 = arith.maximumf %14, %15 : vector<8x8x32xf32>
    %c0_12 = arith.constant 0 : index
    %c0_13 = arith.constant 0 : index
    %17 = vector.load %arg6[%c0_12, %c0_13] : memref<1x32xf32, #tpu.memory_space<vmem>>, vector<1x32xf32>
    %18 = vector.shape_cast %17 : vector<1x32xf32> to vector<1x1x32xf32>
    %19 = vector.broadcast %18 : vector<1x1x32xf32> to vector<8x8x32xf32>
    %20 = arith.mulf %16, %19 : vector<8x8x32xf32>
    %cst_14 = arith.constant dense<0.000000e+00> : vector<8x8xf32>
    %21 = vector.multi_reduction <add>, %20, %cst_14 [2] : vector<8x8x32xf32> to vector<8x8xf32>
    %cst_15 = arith.constant dense<0xFF800000> : vector<8xf32>
    %22 = vector.multi_reduction <maximumf>, %21, %cst_15 [1] : vector<8x8xf32> to vector<8xf32>
    %23 = vector.shape_cast %22 : vector<8xf32> to vector<8x1xf32>
    %24 = vector.broadcast %23 : vector<8x1xf32> to vector<8x8xf32>
    %25 = arith.subf %21, %24 : vector<8x8xf32>
    %26 = math.exp %25 : vector<8x8xf32>
    %cst_16 = arith.constant dense<0.000000e+00> : vector<8xf32>
    %27 = vector.multi_reduction <add>, %26, %cst_16 [1] : vector<8x8xf32> to vector<8xf32>
    %28 = vector.shape_cast %27 : vector<8xf32> to vector<8x1xf32>
    %29 = tpu.reciprocal %28 {approx = true} : vector<8x1xf32> -> vector<8x1xf32>
    %30 = vector.broadcast %29 : vector<8x1xf32> to vector<8x8xf32>
    %31 = arith.mulf %26, %30 : vector<8x8xf32>
    %32 = vector.shape_cast %31 : vector<8x8xf32> to vector<8x8x1xf32>
    %33 = vector.broadcast %32 : vector<8x8x1xf32> to vector<8x8x32xf32>
    %34 = arith.mulf %0, %33 : vector<8x8x32xf32>
    %cst_17 = arith.constant dense<0.000000e+00> : vector<8x32xf32>
    %35 = vector.multi_reduction <add>, %34, %cst_17 [1] : vector<8x8x32xf32> to vector<8x32xf32>
    %c0_18 = arith.constant 0 : index
    %c0_19 = arith.constant 0 : index
    %36 = vector.load %arg7[%c0_18, %c0_19] : memref<32x16xf32, #tpu.memory_space<vmem>>, vector<32x16xf32>
    %cst_20 = arith.constant dense<0.000000e+00> : vector<8x16xf32>
    %37 = tpu.matmul %35, %36, %cst_20 {dimension_numbers = #tpu.dot_dimension_numbers<[1], [0], [0], [1], [0, 0, 1, 1], [], []>} : vector<8x32xf32>, vector<32x16xf32>, vector<8x16xf32> -> vector<8x16xf32>
    %c0_21 = arith.constant 0 : index
    %c0_22 = arith.constant 0 : index
    %38 = vector.load %arg8[%c0_21, %c0_22] : memref<1x16xf32, #tpu.memory_space<vmem>>, vector<1x16xf32>
    %39 = vector.broadcast %38 : vector<1x16xf32> to vector<8x16xf32>
    %40 = arith.addf %37, %39 : vector<8x16xf32>
    %cst_23 = arith.constant 0.000000e+00 : f32
    %41 = vector.broadcast %cst_23 : f32 to vector<8x16xf32>
    %42 = arith.maximumf %40, %41 : vector<8x16xf32>
    %c0_24 = arith.constant 0 : index
    %c0_25 = arith.constant 0 : index
    %43 = vector.load %arg9[%c0_24, %c0_25] : memref<8x16xf32, #tpu.memory_space<vmem>>, vector<8x16xf32>
    tpu.vector_store %arg9[%c0_24, %c0_25], %42 {strides = array<i32>} : memref<8x16xf32, #tpu.memory_space<vmem>>, vector<8x16xf32>,
    return
  }
  func.func @transform_0(%arg0: i32) -> (i32, i32, i32) {
    %c0_i32 = arith.constant 0 : i32
    %c0_i32_0 = arith.constant 0 : i32
    %c0_i32_1 = arith.constant 0 : i32
    return %arg0, %c0_i32, %c0_i32_0 : i32, i32, i32
  }
  func.func @transform_1(%arg0: i32) -> (i32, i32) {
    %c0_i32 = arith.constant 0 : i32
    %c0_i32_0 = arith.constant 0 : i32
    return %arg0, %c0_i32 : i32, i32
  }
  func.func @transform_2(%arg0: i32) -> (i32, i32) {
    %c0_i32 = arith.constant 0 : i32
    %c0_i32_0 = arith.constant 0 : i32
    %c0_i32_1 = arith.constant 0 : i32
    return %c0_i32, %c0_i32_0 : i32, i32
  }
  func.func @transform_3(%arg0: i32) -> (i32, i32) {
    %c0_i32 = arith.constant 0 : i32
    %c0_i32_0 = arith.constant 0 : i32
    %c0_i32_1 = arith.constant 0 : i32
    return %c0_i32, %c0_i32_0 : i32, i32
  }
  func.func @transform_4(%arg0: i32) -> (i32, i32) {
    %c0_i32 = arith.constant 0 : i32
    %c0_i32_0 = arith.constant 0 : i32
    %c0_i32_1 = arith.constant 0 : i32
    return %c0_i32, %c0_i32_0 : i32, i32
  }
  func.func @transform_5(%arg0: i32) -> (i32, i32) {
    %c0_i32 = arith.constant 0 : i32
    %c0_i32_0 = arith.constant 0 : i32
    %c0_i32_1 = arith.constant 0 : i32
    return %c0_i32, %c0_i32_0 : i32, i32
  }
  func.func @transform_6(%arg0: i32) -> (i32, i32) {
    %c0_i32 = arith.constant 0 : i32
    %c0_i32_0 = arith.constant 0 : i32
    %c0_i32_1 = arith.constant 0 : i32
    return %c0_i32, %c0_i32_0 : i32, i32
  }
  func.func @transform_7(%arg0: i32) -> (i32, i32) {
    %c0_i32 = arith.constant 0 : i32
    %c0_i32_0 = arith.constant 0 : i32
    %c0_i32_1 = arith.constant 0 : i32
    return %c0_i32, %c0_i32_0 : i32, i32
  }
  func.func @transform_8(%arg0: i32) -> (i32, i32) {
    %c0_i32 = arith.constant 0 : i32
    %c0_i32_0 = arith.constant 0 : i32
    return %arg0, %c0_i32 : i32, i32
  }
}

</mosaic_0001>

<llo_original>
// kernel: tpu_custom_call.1
$region0: #{tpu_custom_call.1}
  #allocation0 [shape = 'u32[]', space=smem, size = 0x4, offset = 0x4, fixed_abs, tag = 'smem constant byte address 0x4 - core index']
  #allocation1 [shape = 'u32[144,128]{1,0:T(1,128)}', space=vmem, size = 0x12000, scoped, tag = 'internal scratch']
  %s0 = inlined_call_operand.hbm [shape: f32[16,8,32], index: 0, kind: input, shape index: {}]
  %s1 = inlined_call_operand.vmem [shape: f32[16,32], index: 1, kind: input, shape index: {}]
  %s2 = inlined_call_operand.vmem [shape: f32[32,32], index: 2, kind: input, shape index: {}]
  %s3 = inlined_call_operand.hbm [shape: f32[32,32], index: 3, kind: input, shape index: {}]
  %s4 = inlined_call_operand.vmem [shape: f32[1,32], index: 4, kind: input, shape index: {}]
  %s5 = inlined_call_operand.vmem [shape: f32[1,32], index: 5, kind: input, shape index: {}]
  %s6 = inlined_call_operand.vmem [shape: f32[32,16], index: 6, kind: input, shape index: {}]
  %s7 = inlined_call_operand.vmem [shape: f32[1,16], index: 7, kind: input, shape index: {}]
  %s8 = inlined_call_operand.hbm [shape: f32[16,16], index: 8, kind: output, shape index: {}]
  %s9 = sld [smem:[#allocation0]]
  $region73: #{tpu_custom_call.1} parent=0
    _
  %s11 = ssub.s32 1, %s9
  %s12 = scalar_select 0, %s11, %s9
  $region1: #{tpu_custom_call.1} parent=0
    #allocation2 [shape = 'u8[65536]{0}', space=vmem, size = 0x10000, scoped, tag = 'input window, operand 0']
    #allocation3 [shape = 's32[2]{0}', space=sflag, size = 0x8, scoped, tag = 'scoped memory for tpu_custom_call.1']
    #allocation4 [shape = 's32[2]{0}', space=sflag, size = 0x8, scoped, tag = 'scoped memory for tpu_custom_call.1']
    #allocation5 [shape = 'u8[16384]{0}', space=vmem, size = 0x4000, scoped, tag = 'input window, operand 3, single buffered']
    #allocation6 [shape = 's32[1]{0}', space=sflag, size = 0x4, scoped, tag = 'scoped memory for tpu_custom_call.1']
    #allocation7 [shape = 'u8[8192]{0}', space=vmem, size = 0x2000, scoped, tag = 'output window, operand 0']
    %13 = vsyncpa [#allocation3], 0
    %s14 = scalar_lea.sflag [#allocation3], 1
    %15 = vsyncpa %s14, 0
    %16 = vsyncpa [#allocation6], 0
    %17 = vsyncpa [#allocation4], 0
    %s18 = scalar_lea.sflag [#allocation4], 1
    %19 = vsyncpa %s18, 0
    loop: start=0, step=1, limit=4
    $region2: #{tpu_custom_call.1} parent=1 // loop_pre_header
      _
    $region3: #{tpu_custom_call.1} parent=1 // loop_header
      %s21 = sphi 0, %s25
      %p22 = scmp.ge.s32.totalorder %s21, 4
      %s31 = sphi 0, %s33
      %s34 = sphi 0, %s31
      %s35 = sphi 0, %s34
      %s51 = sphi 0, %s35
      %s57 = sphi 0, %s59
      %s60 = sphi 0, %s57
      %s61 = sphi 0, %s60
      %s77 = sphi 0, %s61
      %s81 = sphi 0, %s81
      %s83 = sphi 0, %s81
      %s84 = sphi 0, %s83
      %s98 = sphi 0, %s84
      %s102 = sphi 0, %s102
      %s104 = sphi 0, %s102
      %s105 = sphi 0, %s104
      %s119 = sphi 0, %s105
      %s123 = sphi 0, %s123
      %s125 = sphi 0, %s123
      %s126 = sphi 0, %s125
      %s140 = sphi 0, %s126
      %s144 = sphi 0, %s144
      %s146 = sphi 0, %s144
      %s147 = sphi 0, %s146
      %s161 = sphi 0, %s147
      %s165 = sphi 0, %s165
      %s167 = sphi 0, %s165
      %s168 = sphi 0, %s167
      %s182 = sphi 0, %s168
      %s186 = sphi 0, %s186
      %s188 = sphi 0, %s186
      %s189 = sphi 0, %s188
      %s203 = sphi 0, %s189
      %s209 = sphi 0, %s211
      %s212 = sphi 0, %s209
      %s213 = sphi 0, %s212
      %s229 = sphi 0, %s213
    $region4: #{tpu_custom_call.1} parent=1 // loop_header_branch
      %24 = sbr.rel (%p22) target = $region8
    $region5: #{tpu_custom_call.1} parent=1 // loop_body
      %s26 = ssub.s32 %s21, 1
      %s27 = ssub.s32 %s21, 2
      %s28 = sadd.s32 %s21, 1
      %s29 = ssub.s32 %s21, %s28
      %p30 = scmp.eq.s32.totalorder %s29, 0
      %s32 = sadd.s32 %s31, 1
      %s33 = scalar_select %p30, %s31, %s32
      %p36 = pneg %p30
      %p37 = scmp.eq.s32.totalorder %s21, 1
      %p38 = por %p36, %p37
      %p39 = scmp.ne.s32.totalorder %s31, %s34
      %p40 = scmp.eq.s32.totalorder %s21, 0
      %p41 = por %p39, %p40
      %p42 = scmp.ne.s32.totalorder %s31, %s34
      %p43 = scmp.eq.s32.totalorder %s26, 1
      %p44 = por %p42, %p43
      %p45 = scmp.ne.s32.totalorder %s34, %s35
      %p46 = scmp.eq.s32.totalorder %s26, 0
      %p47 = por %p45, %p46
      %p48 = scmp.ne.s32.totalorder %s34, %s35
      %p49 = scmp.eq.s32.totalorder %s27, 1
      %p50 = por %p48, %p49
      %p52 = scmp.ne.s32.totalorder %s35, %s51
      %p53 = scmp.eq.s32.totalorder %s27, 0
      %p54 = por %p52, %p53
      %s55 = ssub.s32 %s21, %s28
      %p56 = scmp.eq.s32.totalorder %s55, 0
      %s58 = sadd.s32 %s57, 1
      %s59 = scalar_select %p56, %s57, %s58
      %p62 = pneg %p56
      %p63 = scmp.eq.s32.totalorder %s21, 1
      %p64 = por %p62, %p63
      %p65 = scmp.ne.s32.totalorder %s57, %s60
      %p66 = scmp.eq.s32.totalorder %s21, 0
      %p67 = por %p65, %p66
      %p68 = scmp.ne.s32.totalorder %s57, %s60
      %p69 = scmp.eq.s32.totalorder %s26, 1
      %p70 = por %p68, %p69
      %p71 = scmp.ne.s32.totalorder %s60, %s61
      %p72 = scmp.eq.s32.totalorder %s26, 0
      %p73 = por %p71, %p72
      %p74 = scmp.ne.s32.totalorder %s60, %s61
      %p75 = scmp.eq.s32.totalorder %s27, 1
      %p76 = por %p74, %p75
      %p78 = scmp.ne.s32.totalorder %s61, %s77
      %p79 = scmp.eq.s32.totalorder %s27, 0
      %p80 = por %p78, %p79
      %s82 = sadd.s32 %s81, 1
      %p85 = scmp.eq.s32.totalorder %s21, 1
      %p86 = scmp.ne.s32.totalorder %s81, %s83
      %p87 = scmp.eq.s32.totalorder %s21, 0
      %p88 = por %p86, %p87
      %p89 = scmp.ne.s32.totalorder %s81, %s83
      %p90 = scmp.eq.s32.totalorder %s26, 1
      %p91 = por %p89, %p90
      %p92 = scmp.ne.s32.totalorder %s83, %s84
      %p93 = scmp.eq.s32.totalorder %s26, 0
      %p94 = por %p92, %p93
      %p95 = scmp.ne.s32.totalorder %s83, %s84
      %p96 = scmp.eq.s32.totalorder %s27, 1
      %p97 = por %p95, %p96
      %p99 = scmp.ne.s32.totalorder %s84, %s98
      %p100 = scmp.eq.s32.totalorder %s27, 0
      %p101 = por %p99, %p100
      %s103 = sadd.s32 %s102, 1
      %p106 = scmp.eq.s32.totalorder %s21, 1
      %p107 = scmp.ne.s32.totalorder %s102, %s104
      %p108 = scmp.eq.s32.totalorder %s21, 0
      %p109 = por %p107, %p108
      %p110 = scmp.ne.s32.totalorder %s102, %s104
      %p111 = scmp.eq.s32.totalorder %s26, 1
      %p112 = por %p110, %p111
      %p113 = scmp.ne.s32.totalorder %s104, %s105
      %p114 = scmp.eq.s32.totalorder %s26, 0
      %p115 = por %p113, %p114
      %p116 = scmp.ne.s32.totalorder %s104, %s105
      %p117 = scmp.eq.s32.totalorder %s27, 1
      %p118 = por %p116, %p117
      %p120 = scmp.ne.s32.totalorder %s105, %s119
      %p121 = scmp.eq.s32.totalorder %s27, 0
      %p122 = por %p120, %p121
      %s124 = sadd.s32 %s123, 1
      %p127 = scmp.eq.s32.totalorder %s21, 1
      %p128 = scmp.ne.s32.totalorder %s123, %s125
      %p129 = scmp.eq.s32.totalorder %s21, 0
      %p130 = por %p128, %p129
      %p131 = scmp.ne.s32.totalorder %s123, %s125
      %p132 = scmp.eq.s32.totalorder %s26, 1
      %p133 = por %p131, %p132
      %p134 = scmp.ne.s32.totalorder %s125, %s126
      %p135 = scmp.eq.s32.totalorder %s26, 0
      %p136 = por %p134, %p135
      %p137 = scmp.ne.s32.totalorder %s125, %s126
      %p138 = scmp.eq.s32.totalorder %s27, 1
      %p139 = por %p137, %p138
      %p141 = scmp.ne.s32.totalorder %s126, %s140
      %p142 = scmp.eq.s32.totalorder %s27, 0
      %p143 = por %p141, %p142
      %s145 = sadd.s32 %s144, 1
      %p148 = scmp.eq.s32.totalorder %s21, 1
      %p149 = scmp.ne.s32.totalorder %s144, %s146
      %p150 = scmp.eq.s32.totalorder %s21, 0
      %p151 = por %p149, %p150
      %p152 = scmp.ne.s32.totalorder %s144, %s146
      %p153 = scmp.eq.s32.totalorder %s26, 1
      %p154 = por %p152, %p153
      %p155 = scmp.ne.s32.totalorder %s146, %s147
      %p156 = scmp.eq.s32.totalorder %s26, 0
      %p157 = por %p155, %p156
      %p158 = scmp.ne.s32.totalorder %s146, %s147
      %p159 = scmp.eq.s32.totalorder %s27, 1
      %p160 = por %p158, %p159
      %p162 = scmp.ne.s32.totalorder %s147, %s161
      %p163 = scmp.eq.s32.totalorder %s27, 0
      %p164 = por %p162, %p163
      %s166 = sadd.s32 %s165, 1
      %p169 = scmp.eq.s32.totalorder %s21, 1
      %p170 = scmp.ne.s32.totalorder %s165, %s167
      %p171 = scmp.eq.s32.totalorder %s21, 0
      %p172 = por %p170, %p171
      %p173 = scmp.ne.s32.totalorder %s165, %s167
      %p174 = scmp.eq.s32.totalorder %s26, 1
      %p175 = por %p173, %p174
      %p176 = scmp.ne.s32.totalorder %s167, %s168
      %p177 = scmp.eq.s32.totalorder %s26, 0
      %p178 = por %p176, %p177
      %p179 = scmp.ne.s32.totalorder %s167, %s168
      %p180 = scmp.eq.s32.totalorder %s27, 1
      %p181 = por %p179, %p180
      %p183 = scmp.ne.s32.totalorder %s168, %s182
      %p184 = scmp.eq.s32.totalorder %s27, 0
      %p185 = por %p183, %p184
      %s187 = sadd.s32 %s186, 1
      %p190 = scmp.eq.s32.totalorder %s21, 1
      %p191 = scmp.ne.s32.totalorder %s186, %s188
      %p192 = scmp.eq.s32.totalorder %s21, 0
      %p193 = por %p191, %p192
      %p194 = scmp.ne.s32.totalorder %s186, %s188
      %p195 = scmp.eq.s32.totalorder %s26, 1
      %p196 = por %p194, %p195
      %p197 = scmp.ne.s32.totalorder %s188, %s189
      %p198 = scmp.eq.s32.totalorder %s26, 0
      %p199 = por %p197, %p198
      %p200 = scmp.ne.s32.totalorder %s188, %s189
      %p201 = scmp.eq.s32.totalorder %s27, 1
      %p202 = por %p200, %p201
      %p204 = scmp.ne.s32.totalorder %s189, %s203
      %p205 = scmp.eq.s32.totalorder %s27, 0
      %p206 = por %p204, %p205
      %s207 = ssub.s32 %s21, %s28
      %p208 = scmp.eq.s32.totalorder %s207, 0
      %s210 = sadd.s32 %s209, 1
      %s211 = scalar_select %p208, %s209, %s210
      %p214 = pneg %p208
      %p215 = scmp.eq.s32.totalorder %s21, 1
      %p216 = por %p214, %p215
      %p217 = scmp.ne.s32.totalorder %s209, %s212
      %p218 = scmp.eq.s32.totalorder %s21, 0
      %p219 = por %p217, %p218
      %p220 = scmp.ne.s32.totalorder %s209, %s212
      %p221 = scmp.eq.s32.totalorder %s26, 1
      %p222 = por %p220, %p221
      %p223 = scmp.ne.s32.totalorder %s212, %s213
      %p224 = scmp.eq.s32.totalorder %s26, 0
      %p225 = por %p223, %p224
      %p226 = scmp.ne.s32.totalorder %s212, %s213
      %p227 = scmp.eq.s32.totalorder %s27, 1
      %p228 = por %p226, %p227
      %p230 = scmp.ne.s32.totalorder %s213, %s229
      %p231 = scmp.eq.s32.totalorder %s27, 0
      %p232 = por %p230, %p231
      %p233 = scmp.le.s32.totalorder 1, %s21
      %p234 = scmp.lt.s32.totalorder %s21, 3
      %p235 = pnand %p233, %p234
      %p236 = pneg %p235
      // Predicated region
      $region9: #{tpu_custom_call.1} parent=5 // pred_check
        _
      $region10: #{tpu_custom_call.1} parent=5 // pred_check_branch
        %238 = sbr.rel (%p235) target = $region12
      $region11: #{tpu_custom_call.1} parent=5 // pred_region
        %s239 = ssub.s32 %s21, 1
        // Predicated region
        $region13: #{tpu_custom_call.1} parent=11 // pred_check
          %p240 = pneg %p94
        $region14: #{tpu_custom_call.1} parent=11 // pred_check_branch
          %242 = sbr.rel (%p240) target = $region16
        $region15: #{tpu_custom_call.1} parent=11 // pred_region
          _
        $region16: #{tpu_custom_call.1} parent=11 // pred_fallthru
          _
        // Predicated region
        $region17: #{tpu_custom_call.1} parent=11 // pred_check
          %p243 = pneg %p115
        $region18: #{tpu_custom_call.1} parent=11 // pred_check_branch
          %245 = sbr.rel (%p243) target = $region20
        $region19: #{tpu_custom_call.1} parent=11 // pred_region
          %s247 = ssub.s32 512, 512
          %248 = vsyncadd [#allocation6], %s247
          %s249 = sshll.u32 [#allocation5], 4
          %s250 = int_to_ptr.vmem [resolvable:$true] %s249
          %255 = dma.hbm_to_vmem [thread:$0]  %s3, 512, %s250, [#allocation6], 128, 128, 8
        $region20: #{tpu_custom_call.1} parent=11 // pred_fallthru
          _
        // Predicated region
        $region21: #{tpu_custom_call.1} parent=11 // pred_check
          %p256 = pneg %p136
        $region22: #{tpu_custom_call.1} parent=11 // pred_check_branch
          %258 = sbr.rel (%p256) target = $region24
        $region23: #{tpu_custom_call.1} parent=11 // pred_region
          _
        $region24: #{tpu_custom_call.1} parent=11 // pred_fallthru
          _
        // Predicated region
        $region25: #{tpu_custom_call.1} parent=11 // pred_check
          %p259 = pneg %p157
        $region26: #{tpu_custom_call.1} parent=11 // pred_check_branch
          %261 = sbr.rel (%p259) target = $region28
        $region27: #{tpu_custom_call.1} parent=11 // pred_region
          _
        $region28: #{tpu_custom_call.1} parent=11 // pred_fallthru
          _
        // Predicated region
        $region29: #{tpu_custom_call.1} parent=11 // pred_check
          %p262 = pneg %p178
        $region30: #{tpu_custom_call.1} parent=11 // pred_check_branch
          %264 = sbr.rel (%p262) target = $region32
        $region31: #{tpu_custom_call.1} parent=11 // pred_region
          _
        $region32: #{tpu_custom_call.1} parent=11 // pred_fallthru
          _
        // Predicated region
        $region33: #{tpu_custom_call.1} parent=11 // pred_check
          %p265 = pneg %p199
        $region34: #{tpu_custom_call.1} parent=11 // pred_check_branch
          %267 = sbr.rel (%p265) target = $region36
        $region35: #{tpu_custom_call.1} parent=11 // pred_region
          _
        $region36: #{tpu_custom_call.1} parent=11 // pred_fallthru
          _
      $region12: #{tpu_custom_call.1} parent=5 // pred_fallthru
        _
      %p268 = scmp.lt.s32.totalorder %s21, 2
      // Predicated region
      $region37: #{tpu_custom_call.1} parent=5 // pred_check
        %p269 = pneg %p268
      $region38: #{tpu_custom_call.1} parent=5 // pred_check_branch
        %271 = sbr.rel (%p269) target = $region40
      $region39: #{tpu_custom_call.1} parent=5 // pred_region
        // Predicated region
        $region41: #{tpu_custom_call.1} parent=39 // pred_check
          %p272 = pneg %p41
        $region42: #{tpu_custom_call.1} parent=39 // pred_check_branch
          %274 = sbr.rel (%p272) target = $region44
        $region43: #{tpu_custom_call.1} parent=39 // pred_region
          %s275 = sand.u32 %s31, 1
          %s276 = scalar_lea.sflag [#allocation3], %s275
          %s277 = sand.u32 %s31, 1
          %s278 = smul.addr %s277, 64
          %s279 = scalar_lea.vmem [#allocation2], %s278
          %s280 = smul.u32 8, %s21
          %s282 = ssub.s32 1024, 1024
          %283 = vsyncadd %s276, %s282
          %s284 = smul.addr %s280, 128
          %s285 = scalar_lea.hbm %s0, %s284
          %s286 = sshll.u32 %s279, 4
          %s287 = int_to_ptr.vmem [resolvable:$true] %s286
          %292 = dma.hbm_to_vmem [thread:$0]  %s285, 1024, %s287, %s276, 128, 128, 8
        $region44: #{tpu_custom_call.1} parent=39 // pred_fallthru
          _
        // Predicated region
        $region45: #{tpu_custom_call.1} parent=39 // pred_check
          %p293 = pneg %p67
        $region46: #{tpu_custom_call.1} parent=39 // pred_check_branch
          %295 = sbr.rel (%p293) target = $region48
        $region47: #{tpu_custom_call.1} parent=39 // pred_region
          %p296 = scmp.lt.s32.totalorder %s21, 1
          %s297 = scalar_select %p296, %s21, 1
          %s298 = smul.addr %s297, 8
          %s299 = scalar_lea.vmem %s1, %s298
        $region48: #{tpu_custom_call.1} parent=39 // pred_fallthru
          _
      $region40: #{tpu_custom_call.1} parent=5 // pred_fallthru
        _
      %p300 = scmp.le.s32.totalorder 1, %s21
      %p301 = scmp.lt.s32.totalorder %s21, 3
      %p302 = pnand %p300, %p301
      %p303 = pneg %p302
      // Predicated region
      $region49: #{tpu_custom_call.1} parent=5 // pred_check
        _
      $region50: #{tpu_custom_call.1} parent=5 // pred_check_branch
        %305 = sbr.rel (%p302) target = $region52
      $region51: #{tpu_custom_call.1} parent=5 // pred_region
        %s306 = ssub.s32 %s21, 1
        %s307 = sand.u32 %s34, 1
        %s308 = scalar_lea.sflag [#allocation3], %s307
        %s309 = sand.u32 %s34, 1
        %s310 = smul.addr %s309, 64
        %s311 = scalar_lea.vmem [#allocation2], %s310
        // Predicated region
        $region53: #{tpu_custom_call.1} parent=51 // pred_check
          %p312 = pneg %p47
        $region54: #{tpu_custom_call.1} parent=51 // pred_check_branch
          %314 = sbr.rel (%p312) target = $region56
        $region55: #{tpu_custom_call.1} parent=51 // pred_region
          %315 = dma.done %s308, 1024
        $region56: #{tpu_custom_call.1} parent=51 // pred_fallthru
          _
        // Predicated region
        $region57: #{tpu_custom_call.1} parent=51 // pred_check
          %p316 = pneg %p115
        $region58: #{tpu_custom_call.1} parent=51 // pred_check_branch
          %318 = sbr.rel (%p316) target = $region60
        $region59: #{tpu_custom_call.1} parent=51 // pred_region
          %319 = dma.done [#allocation6], 512
        $region60: #{tpu_custom_call.1} parent=51 // pred_fallthru
          _
        %s320 = sand.u32 %s34, 1
        %s321 = scalar_lea.sflag [#allocation3], %s320
        %s322 = sand.u32 %s34, 1
        %s323 = smul.addr %s322, 64
        %s324 = scalar_lea.vmem [#allocation2], %s323
        %p325 = pneg %p47
        %p326 = pneg %p44
        %p327 = scmp.lt.s32.totalorder %s26, 1
        %s328 = scalar_select %p327, %s26, 1
        %s329 = smul.addr %s328, 8
        %s330 = scalar_lea.vmem %s1, %s329
        %p331 = pneg %p73
        %p332 = pneg %p70
        %p333 = pneg %p94
        %p334 = pneg %p91
        %p335 = pneg %p115
        %p336 = pneg %p112
        %p337 = pneg %p136
        %p338 = pneg %p133
        %p339 = pneg %p157
        %p340 = pneg %p154
        %p341 = pneg %p178
        %p342 = pneg %p175
        %p343 = pneg %p199
        %p344 = pneg %p196
        %p345 = pneg %p225
        %p346 = pneg %p222
        %s347 = sand.u32 %s212, 1
        %s348 = scalar_lea.sflag [#allocation4], %s347
        %s349 = sand.u32 %s212, 1
        %s350 = smul.addr %s349, 8
        %s351 = scalar_lea.vmem [#allocation7], %s350
        %s352 = smul.u32 8, %s26
        %p353 = scmp.lt.s32.totalorder %s26, 1
        %s354 = scalar_select %p353, %s26, 1
        %s355 = smul.addr %s354, 8
        %s356 = scalar_lea.vmem %s1, %s355
        %v357 = vld [vmem:[%s311] sm:$0xff]
        %v358 = vld [vmem:[%s311 + $0x8] sm:$0xff]
        %v359 = vld [vmem:[%s311 + $0x10] sm:$0xff]
        %v360 = vld [vmem:[%s311 + $0x18] sm:$0xff]
        %v361 = vld [vmem:[%s311 + $0x20] sm:$0xff]
        %v362 = vld [vmem:[%s311 + $0x28] sm:$0xff]
        %v363 = vld [vmem:[%s311 + $0x30] sm:$0xff]
        %v364 = vld [vmem:[%s311 + $0x38] sm:$0xff]
        %v365 = vld [vmem:[%s356] sm:$0xff]
        %v366 = vld [vmem:[%s2] sm:$0xff]
        %v367 = vld [vmem:[%s2 + $0x8] sm:$0xff]
        %v368 = vld [vmem:[%s2 + $0x10] sm:$0xff]
        %v369 = vld [vmem:[%s2 + $0x18] sm:$0xff]
        %vm370 = vcmask 261120
        %v372 = vsel %vm370, %v365, 0
        %374 = vmatprep.subr.mxu0 0.0
        %375 = vmatpush1.msra.mxu0 0.0
        %376 = vmatprep.subr.mxu0 0.0
        %377 = vmatpush1.msra.mxu0 0.0
        %378 = vmatprep.subr.mxu0 0.0
        %379 = vmatpush1.msra.mxu0 0.0
        %380 = vmatprep.subr.mxu0 0.0
        %381 = vmatpush1.msra.mxu0 0.0
        %382 = vmatprep.subr.mxu0 0.0
        %383 = vmatpush1.msra.mxu0 0.0
        %384 = vmatprep.subr.mxu0 0.0
        %385 = vmatpush1.msra.mxu0 0.0
        %386 = vmatprep.subr.mxu0 0.0
        %387 = vmatpush1.msra.mxu0 0.0
        %388 = vmatprep.subr.mxu0 0.0
        %389 = vmatpush1.msra.mxu0 0.0
        %390 = vmatprep.subr.mxu0 0.0
        %391 = vmatpush1.msra.mxu0 0.0
        %392 = vmatprep.subr.mxu0 0.0
        %393 = vmatpush1.msra.mxu0 0.0
        %394 = vmatprep.subr.mxu0 0.0
        %395 = vmatpush1.msra.mxu0 0.0
        %396 = vmatprep.subr.mxu0 0.0
        %397 = vmatpush1.msra.mxu0 0.0
        %398 = vmatprep.subr.mxu0 0.0
        %399 = vmatpush1.msra.mxu0 %v369
        %400 = vmatprep.subr.mxu0 0.0
        %401 = vmatpush1.msra.mxu0 %v368
        %402 = vmatprep.subr.mxu0 0.0
        %403 = vmatpush1.msra.mxu0 %v367
        %404 = vmatprep.subr.mxu0 0.0
        %405 = vmatpush1.msra.mxu0 %v366
        %406 = vmatprep.subr.mxu0 0.0
        %407 = vmatpush2.msra.mxu0 0.0
        %408 = vmatprep.subr.mxu0 0.0
        %409 = vmatpush2.msra.mxu0 0.0
        %410 = vmatprep.subr.mxu0 0.0
        %411 = vmatpush2.msra.mxu0 0.0
        %412 = vmatprep.subr.mxu0 0.0
        %413 = vmatpush2.msra.mxu0 0.0
        %414 = vmatprep.subr.mxu0 0.0
        %415 = vmatpush2.msra.mxu0 0.0
        %416 = vmatprep.subr.mxu0 0.0
        %417 = vmatpush2.msra.mxu0 0.0
        %418 = vmatprep.subr.mxu0 0.0
        %419 = vmatpush2.msra.mxu0 0.0
        %420 = vmatprep.subr.mxu0 0.0
        %421 = vmatpush2.msra.mxu0 0.0
        %422 = vmatprep.subr.mxu0 0.0
        %423 = vmatpush2.msra.mxu0 0.0
        %424 = vmatprep.subr.mxu0 0.0
        %425 = vmatpush2.msra.mxu0 0.0
        %426 = vmatprep.subr.mxu0 0.0
        %427 = vmatpush2.msra.mxu0 0.0
        %428 = vmatprep.subr.mxu0 0.0
        %429 = vmatpush2.msra.mxu0 0.0
        %430 = vmatprep.subr.mxu0 0.0
        %431 = vmatpush2.msra.mxu0 0.0
        %432 = vmatprep.subr.mxu0 0.0
        %433 = vmatpush2.msra.mxu0 0.0
        %434 = vmatprep.subr.mxu0 0.0
        %435 = vmatpush2.msra.mxu0 0.0
        %436 = vmatprep.subr.mxu0 0.0
        %437 = vmatpush2.msra.mxu0 0.0
        %438 = vmatprep.mubr.f32.mxu0 0.0
        %439 = vmatmul.mubr.f32.gmra.mxu0 %v372
        %v440 = vpop.f32.mrf.mxu0
        %v441 = vadd.f32 0.0, %v440
        %v442 = vpop.f32.mrf.mxu0
        %443 = vdwg.mxu0
        %v444 = vld [vmem:[#allocation5] sm:$0xff]
        %v445 = vld [vmem:[#allocation5 + $0x8] sm:$0xff]
        %v446 = vld [vmem:[#allocation5 + $0x10] sm:$0xff]
        %v447 = vld [vmem:[#allocation5 + $0x18] sm:$0xff]
        %v449 = vsel %vm370, %v357, 0
        %v452 = vsel %vm370, %v358, 0
        %v455 = vsel %vm370, %v359, 0
        %v458 = vsel %vm370, %v360, 0
        %v461 = vsel %vm370, %v361, 0
        %v464 = vsel %vm370, %v362, 0
        %v467 = vsel %vm370, %v363, 0
        %v470 = vsel %vm370, %v364, 0
        %472 = vmatprep.subr.mxu0 0.0
        %473 = vmatpush1.msra.mxu0 0.0
        %474 = vmatprep.subr.mxu0 0.0
        %475 = vmatpush1.msra.mxu0 0.0
        %476 = vmatprep.subr.mxu0 0.0
        %477 = vmatpush1.msra.mxu0 0.0
        %478 = vmatprep.subr.mxu0 0.0
        %479 = vmatpush1.msra.mxu0 0.0
        %480 = vmatprep.subr.mxu0 0.0
        %481 = vmatpush1.msra.mxu0 0.0
        %482 = vmatprep.subr.mxu0 0.0
        %483 = vmatpush1.msra.mxu0 0.0
        %484 = vmatprep.subr.mxu0 0.0
        %485 = vmatpush1.msra.mxu0 0.0
        %486 = vmatprep.subr.mxu0 0.0
        %487 = vmatpush1.msra.mxu0 0.0
        %488 = vmatprep.subr.mxu0 0.0
        %489 = vmatpush1.msra.mxu0 0.0
        %490 = vmatprep.subr.mxu0 0.0
        %491 = vmatpush1.msra.mxu0 0.0
        %492 = vmatprep.subr.mxu0 0.0
        %493 = vmatpush1.msra.mxu0 0.0
        %494 = vmatprep.subr.mxu0 0.0
        %495 = vmatpush1.msra.mxu0 0.0
        %496 = vmatprep.subr.mxu0 0.0
        %497 = vmatpush1.msra.mxu0 %v447
        %498 = vmatprep.subr.mxu0 0.0
        %499 = vmatpush1.msra.mxu0 %v446
        %500 = vmatprep.subr.mxu0 0.0
        %501 = vmatpush1.msra.mxu0 %v445
        %502 = vmatprep.subr.mxu0 0.0
        %503 = vmatpush1.msra.mxu0 %v444
        %504 = vmatprep.subr.mxu0 0.0
        %505 = vmatpush2.msra.mxu0 0.0
        %506 = vmatprep.subr.mxu0 0.0
        %507 = vmatpush2.msra.mxu0 0.0
        %508 = vmatprep.subr.mxu0 0.0
        %509 = vmatpush2.msra.mxu0 0.0
        %510 = vmatprep.subr.mxu0 0.0
        %511 = vmatpush2.msra.mxu0 0.0
        %512 = vmatprep.subr.mxu0 0.0
        %513 = vmatpush2.msra.mxu0 0.0
        %514 = vmatprep.subr.mxu0 0.0
        %515 = vmatpush2.msra.mxu0 0.0
        %516 = vmatprep.subr.mxu0 0.0
        %517 = vmatpush2.msra.mxu0 0.0
        %518 = vmatprep.subr.mxu0 0.0
        %519 = vmatpush2.msra.mxu0 0.0
        %520 = vmatprep.subr.mxu0 0.0
        %521 = vmatpush2.msra.mxu0 0.0
        %522 = vmatprep.subr.mxu0 0.0
        %523 = vmatpush2.msra.mxu0 0.0
        %524 = vmatprep.subr.mxu0 0.0
        %525 = vmatpush2.msra.mxu0 0.0
        %526 = vmatprep.subr.mxu0 0.0
        %527 = vmatpush2.msra.mxu0 0.0
        %528 = vmatprep.subr.mxu0 0.0
        %529 = vmatpush2.msra.mxu0 0.0
        %530 = vmatprep.subr.mxu0 0.0
        %531 = vmatpush2.msra.mxu0 0.0
        %532 = vmatprep.subr.mxu0 0.0
        %533 = vmatpush2.msra.mxu0 0.0
        %534 = vmatprep.subr.mxu0 0.0
        %535 = vmatpush2.msra.mxu0 0.0
        %536 = vmatprep.mubr.f32.mxu0 0.0
        %537 = vmatmul.mubr.f32.gmra.mxu0 %v449
        %v538 = vpop.f32.mrf.mxu0
        %v539 = vadd.f32 0.0, %v538
        %v540 = vpop.f32.mrf.mxu0
        %541 = vmatprep.mubr.f32.mxu0 0.0
        %542 = vmatmul.mubr.f32.gmra.mxu0 %v452
        %v543 = vpop.f32.mrf.mxu0
        %v544 = vadd.f32 0.0, %v543
        %v545 = vpop.f32.mrf.mxu0
        %546 = vmatprep.mubr.f32.mxu0 0.0
        %547 = vmatmul.mubr.f32.gmra.mxu0 %v455
        %v548 = vpop.f32.mrf.mxu0
        %v549 = vadd.f32 0.0, %v548
        %v550 = vpop.f32.mrf.mxu0
        %551 = vmatprep.mubr.f32.mxu0 0.0
        %552 = vmatmul.mubr.f32.gmra.mxu0 %v458
        %v553 = vpop.f32.mrf.mxu0
        %v554 = vadd.f32 0.0, %v553
        %v555 = vpop.f32.mrf.mxu0
        %556 = vmatprep.mubr.f32.mxu0 0.0
        %557 = vmatmul.mubr.f32.gmra.mxu0 %v461
        %v558 = vpop.f32.mrf.mxu0
        %v559 = vadd.f32 0.0, %v558
        %v560 = vpop.f32.mrf.mxu0
        %561 = vmatprep.mubr.f32.mxu0 0.0
        %562 = vmatmul.mubr.f32.gmra.mxu0 %v464
        %v563 = vpop.f32.mrf.mxu0
        %v564 = vadd.f32 0.0, %v563
        %v565 = vpop.f32.mrf.mxu0
        %566 = vmatprep.mubr.f32.mxu0 0.0
        %567 = vmatmul.mubr.f32.gmra.mxu0 %v467
        %v568 = vpop.f32.mrf.mxu0
        %v569 = vadd.f32 0.0, %v568
        %v570 = vpop.f32.mrf.mxu0
        %571 = vmatprep.mubr.f32.mxu0 0.0
        %572 = vmatmul.mubr.f32.gmra.mxu0 %v470
        %v573 = vpop.f32.mrf.mxu0
        %v574 = vadd.f32 0.0, %v573
        %v575 = vpop.f32.mrf.mxu0
        %576 = vdwg.mxu0
        %v578 = vcombine.high %v441, %v441
        %v580 = vunpack.c.l.s4 1966171168
        %v581 = vunpack.c.0.s8 %v580
        %v582 = vlaneseq
        %v583 = vshrl.u32 %v582, 7
        %v584 = vsub.s32 %v581, %v583
        %v585 = vrot.slane %v441, %v584
        %v587 = vunpack.c.l.s4 1966171168
        %v588 = vunpack.c.0.s8 %v587
        %v589 = vlaneseq
        %v590 = vshrl.u32 %v589, 7
        %v591 = vsub.s32 %v588, %v590
        %v592 = vrot.slane %v578, %v591
        %v593 = vcombine.high %v585, %v585
        %v594 = vcombine.high %v592, %v592
        %v596 = vunpack.c.l.s4 1966171168
        %v597 = vunpack.c.0.s8 %v596
        %v598 = vlaneseq
        %v599 = vshrl.u32 %v598, 7
        %v600 = vsub.s32 %v597, %v599
        %v601 = vrot.slane %v585, %v600
        %v603 = vunpack.c.l.s4 1966171168
        %v604 = vunpack.c.0.s8 %v603
        %v605 = vlaneseq
        %v606 = vshrl.u32 %v605, 7
        %v607 = vsub.s32 %v604, %v606
        %v608 = vrot.slane %v592, %v607
        %v610 = vunpack.c.l.s4 1966171168
        %v611 = vunpack.c.0.s8 %v610
        %v612 = vlaneseq
        %v613 = vshrl.u32 %v612, 7
        %v614 = vsub.s32 %v611, %v613
        %v615 = vrot.slane %v593, %v614
        %v617 = vunpack.c.l.s4 1966171168
        %v618 = vunpack.c.0.s8 %v617
        %v619 = vlaneseq
        %v620 = vshrl.u32 %v619, 7
        %v621 = vsub.s32 %v618, %v620
        %v622 = vrot.slane %v594, %v621
        %v623 = vcombine.high %v601, %v601
        %v624 = vcombine.high %v608, %v608
        %v625 = vcombine.high %v615, %v615
        %v626 = vcombine.high %v622, %v622
        %v627 = vlaneseq
        %v628 = vshrl.u32 %v627, 7
        %v629 = vsub.s32 0, %v628
        %v630 = vrot.slane %v601, %v629
        %v631 = vlaneseq
        %v632 = vshrl.u32 %v631, 7
        %v633 = vsub.s32 0, %v632
        %v634 = vrot.slane %v615, %v633
        %v635 = vlaneseq
        %v636 = vshrl.u32 %v635, 7
        %v637 = vsub.s32 0, %v636
        %v638 = vrot.slane %v623, %v637
        %v639 = vlaneseq
        %v640 = vshrl.u32 %v639, 7
        %v641 = vsub.s32 0, %v640
        %v642 = vrot.slane %v625, %v641
        %v643 = vlaneseq
        %v644 = vshrl.u32 %v643, 7
        %v645 = vsub.s32 0, %v644
        %v646 = vrot.slane %v608, %v645
        %v647 = vlaneseq
        %v648 = vshrl.u32 %v647, 7
        %v649 = vsub.s32 0, %v648
        %v650 = vrot.slane %v622, %v649
        %v651 = vlaneseq
        %v652 = vshrl.u32 %v651, 7
        %v653 = vsub.s32 0, %v652
        %v654 = vrot.slane %v624, %v653
        %v655 = vlaneseq
        %v656 = vshrl.u32 %v655, 7
        %v657 = vsub.s32 0, %v656
        %v658 = vrot.slane %v626, %v657
        %v667 = vadd.f32 %v539, %v630
        %v668 = vadd.f32 %v544, %v634
        %v669 = vadd.f32 %v549, %v638
        %v670 = vadd.f32 %v554, %v642
        %v671 = vadd.f32 %v559, %v646
        %v672 = vadd.f32 %v564, %v650
        %v673 = vadd.f32 %v569, %v654
        %v674 = vadd.f32 %v574, %v658
        %v675 = vld [vmem:[%s4] sm:$0x1]
        %v677 = vlaneseq
        %v678 = vshrl.u32 %v677, 7
        %v679 = vsub.s32 0, %v678
        %v680 = vrot.slane %v675, %v679
        %v682 = vadd.f32 %v667, %v680
        %v683 = vadd.f32 %v668, %v680
        %v684 = vadd.f32 %v669, %v680
        %v685 = vadd.f32 %v670, %v680
        %v686 = vadd.f32 %v671, %v680
        %v687 = vadd.f32 %v672, %v680
        %v688 = vadd.f32 %v673, %v680
        %v689 = vadd.f32 %v674, %v680
        %v690 = vmax.f32 %v682, 0.0
        %v691 = vmax.f32 %v683, 0.0
        %v692 = vmax.f32 %v684, 0.0
        %v693 = vmax.f32 %v685, 0.0
        %v694 = vmax.f32 %v686, 0.0
        %v695 = vmax.f32 %v687, 0.0
        %v696 = vmax.f32 %v688, 0.0
        %v697 = vmax.f32 %v689, 0.0
        %v698 = vld [vmem:[%s5] sm:$0x1]
        %v700 = vlaneseq
        %v701 = vshrl.u32 %v700, 7
        %v702 = vsub.s32 0, %v701
        %v703 = vrot.slane %v698, %v702
        %v705 = vmul.f32 %v690, %v703
        %v706 = vmul.f32 %v691, %v703
        %v707 = vmul.f32 %v692, %v703
        %v708 = vmul.f32 %v693, %v703
        %v709 = vmul.f32 %v694, %v703
        %v710 = vmul.f32 %v695, %v703
        %v711 = vmul.f32 %v696, %v703
        %v712 = vmul.f32 %v697, %v703
        %v713 = vsel %vm370, %v705, 0.0
        %714 = vadd.xlane.f32.xlu0 %v713
        %v715 = vpop.xlane.xlu0 %714
        %v716 = vsel %vm370, %v706, 0.0
        %717 = vadd.xlane.f32.xlu0 %v716
        %v718 = vpop.xlane.xlu0 %717
        %v719 = vsel %vm370, %v707, 0.0
        %720 = vadd.xlane.f32.xlu0 %v719
        %v721 = vpop.xlane.xlu0 %720
        %v722 = vsel %vm370, %v708, 0.0
        %723 = vadd.xlane.f32.xlu0 %v722
        %v724 = vpop.xlane.xlu0 %723
        %v725 = vsel %vm370, %v709, 0.0
        %726 = vadd.xlane.f32.xlu0 %v725
        %v727 = vpop.xlane.xlu0 %726
        %v728 = vsel %vm370, %v710, 0.0
        %729 = vadd.xlane.f32.xlu0 %v728
        %v730 = vpop.xlane.xlu0 %729
        %v731 = vsel %vm370, %v711, 0.0
        %732 = vadd.xlane.f32.xlu0 %v731
        %v733 = vpop.xlane.xlu0 %732
        %v734 = vsel %vm370, %v712, 0.0
        %735 = vadd.xlane.f32.xlu0 %v734
        %v736 = vpop.xlane.xlu0 %735
        %v745 = vlaneseq
        %v746 = vand.u32 %v745, 127
        %v747 = vlaneseq
        %v748 = vshrl.u32 %v747, 7
        %v749 = vsub.s32 %v746, %v748
        %v750 = vrot.slane %v715, %v749
        %v751 = vlaneseq
        %v752 = vshrl.u32 %v751, 7
        %v753 = vsub.s32 %v746, %v752
        %v754 = vrot.slane %v718, %v753
        %v755 = vlaneseq
        %v756 = vshrl.u32 %v755, 7
        %v757 = vsub.s32 %v746, %v756
        %v758 = vrot.slane %v721, %v757
        %v759 = vlaneseq
        %v760 = vshrl.u32 %v759, 7
        %v761 = vsub.s32 %v746, %v760
        %v762 = vrot.slane %v724, %v761
        %v763 = vlaneseq
        %v764 = vshrl.u32 %v763, 7
        %v765 = vsub.s32 %v746, %v764
        %v766 = vrot.slane %v727, %v765
        %v767 = vlaneseq
        %v768 = vshrl.u32 %v767, 7
        %v769 = vsub.s32 %v746, %v768
        %v770 = vrot.slane %v730, %v769
        %v771 = vlaneseq
        %v772 = vshrl.u32 %v771, 7
        %v773 = vsub.s32 %v746, %v772
        %v774 = vrot.slane %v733, %v773
        %v775 = vlaneseq
        %v776 = vshrl.u32 %v775, 7
        %v777 = vsub.s32 %v746, %v776
        %v778 = vrot.slane %v736, %v777
        %vm779 = vcmask 1041409
        %v780 = vsel %vm779, %v754, %v750
        %vm781 = vcmask 1042434
        %v782 = vsel %vm781, %v758, %v780
        %vm783 = vcmask 1043459
        %v784 = vsel %vm783, %v762, %v782
        %vm785 = vcmask 1044484
        %v786 = vsel %vm785, %v766, %v784
        %vm787 = vcmask 1045509
        %v788 = vsel %vm787, %v770, %v786
        %vm789 = vcmask 1046534
        %v790 = vsel %vm789, %v774, %v788
        %vm791 = vcmask 1047559
        %v792 = vsel %vm791, %v778, %v790
        %vm794 = vcmask 64512
        %v795 = vsel %vm794, %v792, -inf
        %796 = vmax.xlane.f32.xlu0 %v795
        %v797 = vpop.xlane.xlu0 %796
        %v799 = vlaneseq
        %v800 = vshrl.u32 %v799, 7
        %v801 = vsub.s32 0, %v800
        %v802 = vrot.slane %v797, %v801
        %v803 = vlaneseq
        %v804 = vshrl.u32 %v803, 7
        %v805 = vsub.s32 1, %v804
        %v806 = vrot.slane %v797, %v805
        %v807 = vlaneseq
        %v808 = vshrl.u32 %v807, 7
        %v809 = vsub.s32 2, %v808
        %v810 = vrot.slane %v797, %v809
        %v811 = vlaneseq
        %v812 = vshrl.u32 %v811, 7
        %v813 = vsub.s32 3, %v812
        %v814 = vrot.slane %v797, %v813
        %v815 = vlaneseq
        %v816 = vshrl.u32 %v815, 7
        %v817 = vsub.s32 4, %v816
        %v818 = vrot.slane %v797, %v817
        %v819 = vlaneseq
        %v820 = vshrl.u32 %v819, 7
        %v821 = vsub.s32 5, %v820
        %v822 = vrot.slane %v797, %v821
        %v823 = vlaneseq
        %v824 = vshrl.u32 %v823, 7
        %v825 = vsub.s32 6, %v824
        %v826 = vrot.slane %v797, %v825
        %v827 = vlaneseq
        %v828 = vshrl.u32 %v827, 7
        %v829 = vsub.s32 7, %v828
        %v830 = vrot.slane %v797, %v829
        %v839 = vsub.f32 %v715, %v802
        %v840 = vsub.f32 %v718, %v806
        %v841 = vsub.f32 %v721, %v810
        %v842 = vsub.f32 %v724, %v814
        %v843 = vsub.f32 %v727, %v818
        %v844 = vsub.f32 %v730, %v822
        %v845 = vsub.f32 %v733, %v826
        %v846 = vsub.f32 %v736, %v830
        %v847 = vmul.f32 %v839, 1.442695
        %v848 = vpow.pop %v847
        %v849 = vmul.f32 %v840, 1.442695
        %v850 = vpow.pop %v849
        %v851 = vmul.f32 %v841, 1.442695
        %v852 = vpow.pop %v851
        %v853 = vmul.f32 %v842, 1.442695
        %v854 = vpow.pop %v853
        %v855 = vmul.f32 %v843, 1.442695
        %v856 = vpow.pop %v855
        %v857 = vmul.f32 %v844, 1.442695
        %v858 = vpow.pop %v857
        %v859 = vmul.f32 %v845, 1.442695
        %v860 = vpow.pop %v859
        %v861 = vmul.f32 %v846, 1.442695
        %v862 = vpow.pop %v861
        %871 = vset.pattern.permute.xlu0 0
        %872 = vperm.xlu0 %871, %v848
        %v873 = vpop.permute.xlu0 %872
        %874 = vset.pattern.permute.xlu0 0
        %875 = vperm.xlu0 %874, %v850
        %v876 = vpop.permute.xlu0 %875
        %877 = vset.pattern.permute.xlu0 0
        %878 = vperm.xlu0 %877, %v852
        %v879 = vpop.permute.xlu0 %878
        %880 = vset.pattern.permute.xlu0 0
        %881 = vperm.xlu0 %880, %v854
        %v882 = vpop.permute.xlu0 %881
        %883 = vset.pattern.permute.xlu0 0
        %884 = vperm.xlu0 %883, %v856
        %v885 = vpop.permute.xlu0 %884
        %886 = vset.pattern.permute.xlu0 0
        %887 = vperm.xlu0 %886, %v858
        %v888 = vpop.permute.xlu0 %887
        %889 = vset.pattern.permute.xlu0 0
        %890 = vperm.xlu0 %889, %v860
        %v891 = vpop.permute.xlu0 %890
        %892 = vset.pattern.permute.xlu0 0
        %893 = vperm.xlu0 %892, %v862
        %v894 = vpop.permute.xlu0 %893
        %v895 = vlaneseq
        %v896 = vshrl.u32 %v895, 7
        %v897 = vsub.s32 %v746, %v896
        %v898 = vrot.slane %v873, %v897
        %v899 = vlaneseq
        %v900 = vshrl.u32 %v899, 7
        %v901 = vsub.s32 %v746, %v900
        %v902 = vrot.slane %v876, %v901
        %v903 = vlaneseq
        %v904 = vshrl.u32 %v903, 7
        %v905 = vsub.s32 %v746, %v904
        %v906 = vrot.slane %v879, %v905
        %v907 = vlaneseq
        %v908 = vshrl.u32 %v907, 7
        %v909 = vsub.s32 %v746, %v908
        %v910 = vrot.slane %v882, %v909
        %v911 = vlaneseq
        %v912 = vshrl.u32 %v911, 7
        %v913 = vsub.s32 %v746, %v912
        %v914 = vrot.slane %v885, %v913
        %v915 = vlaneseq
        %v916 = vshrl.u32 %v915, 7
        %v917 = vsub.s32 %v746, %v916
        %v918 = vrot.slane %v888, %v917
        %v919 = vlaneseq
        %v920 = vshrl.u32 %v919, 7
        %v921 = vsub.s32 %v746, %v920
        %v922 = vrot.slane %v891, %v921
        %v923 = vlaneseq
        %v924 = vshrl.u32 %v923, 7
        %v925 = vsub.s32 %v746, %v924
        %v926 = vrot.slane %v894, %v925
        %v927 = vsel %vm779, %v902, %v898
        %v928 = vsel %vm781, %v906, %v927
        %v929 = vsel %vm783, %v910, %v928
        %v930 = vsel %vm785, %v914, %v929
        %v931 = vsel %vm787, %v918, %v930
        %v932 = vsel %vm789, %v922, %v931
        %v933 = vsel %vm791, %v926, %v932
        %v935 = vsel %vm794, %v933, 0.0
        %936 = vadd.xlane.f32.xlu0 %v935
        %v937 = vpop.xlane.xlu0 %936
        %v938 = vrcp.pop %v937
        %v940 = vlaneseq
        %v941 = vshrl.u32 %v940, 7
        %v942 = vsub.s32 0, %v941
        %v943 = vrot.slane %v938, %v942
        %v944 = vlaneseq
        %v945 = vshrl.u32 %v944, 7
        %v946 = vsub.s32 1, %v945
        %v947 = vrot.slane %v938, %v946
        %v948 = vlaneseq
        %v949 = vshrl.u32 %v948, 7
        %v950 = vsub.s32 2, %v949
        %v951 = vrot.slane %v938, %v950
        %v952 = vlaneseq
        %v953 = vshrl.u32 %v952, 7
        %v954 = vsub.s32 3, %v953
        %v955 = vrot.slane %v938, %v954
        %v956 = vlaneseq
        %v957 = vshrl.u32 %v956, 7
        %v958 = vsub.s32 4, %v957
        %v959 = vrot.slane %v938, %v958
        %v960 = vlaneseq
        %v961 = vshrl.u32 %v960, 7
        %v962 = vsub.s32 5, %v961
        %v963 = vrot.slane %v938, %v962
        %v964 = vlaneseq
        %v965 = vshrl.u32 %v964, 7
        %v966 = vsub.s32 6, %v965
        %v967 = vrot.slane %v938, %v966
        %v968 = vlaneseq
        %v969 = vshrl.u32 %v968, 7
        %v970 = vsub.s32 7, %v969
        %v971 = vrot.slane %v938, %v970
        %v980 = vmul.f32 %v848, %v943
        %v981 = vmul.f32 %v850, %v947
        %v982 = vmul.f32 %v852, %v951
        %v983 = vmul.f32 %v854, %v955
        %v984 = vmul.f32 %v856, %v959
        %v985 = vmul.f32 %v858, %v963
        %v986 = vmul.f32 %v860, %v967
        %v987 = vmul.f32 %v862, %v971
        %989 = vset.pattern.permute.xlu0 0
        %990 = vperm.xlu0 %989, %v980
        %v991 = vpop.permute.xlu0 %990
        %994 = vset.pattern.permute.xlu0 0
        %995 = vperm.xlu0 %994, %v981
        %v996 = vpop.permute.xlu0 %995
        %999 = vset.pattern.permute.xlu0 0
        %1000 = vperm.xlu0 %999, %v982
        %v1001 = vpop.permute.xlu0 %1000
        %1004 = vset.pattern.permute.xlu0 0
        %1005 = vperm.xlu0 %1004, %v983
        %v1006 = vpop.permute.xlu0 %1005
        %1009 = vset.pattern.permute.xlu0 0
        %1010 = vperm.xlu0 %1009, %v984
        %v1011 = vpop.permute.xlu0 %1010
        %1014 = vset.pattern.permute.xlu0 0
        %1015 = vperm.xlu0 %1014, %v985
        %v1016 = vpop.permute.xlu0 %1015
        %1019 = vset.pattern.permute.xlu0 0
        %1020 = vperm.xlu0 %1019, %v986
        %v1021 = vpop.permute.xlu0 %1020
        %1024 = vset.pattern.permute.xlu0 0
        %1025 = vperm.xlu0 %1024, %v987
        %v1026 = vpop.permute.xlu0 %1025
        %v1028 = vmul.f32 %v357, %v991
        %v1029 = vmul.f32 %v358, %v996
        %v1030 = vmul.f32 %v359, %v1001
        %v1031 = vmul.f32 %v360, %v1006
        %v1032 = vmul.f32 %v361, %v1011
        %v1033 = vmul.f32 %v362, %v1016
        %v1034 = vmul.f32 %v363, %v1021
        %v1035 = vmul.f32 %v364, %v1026
        %v1036 = vsel %vm370, %v1028, 0.0
        %v1037 = vrot.slane %v1036, 4
        %v1038 = vadd.f32 %v1036, %v1037
        %v1039 = vrot.slane %v1038, 2
        %v1040 = vadd.f32 %v1038, %v1039
        %v1041 = vrot.slane %v1040, 1
        %v1042 = vadd.f32 %v1040, %v1041
        %v1043 = vsel %vm370, %v1029, 0.0
        %v1044 = vrot.slane %v1043, 4
        %v1045 = vadd.f32 %v1043, %v1044
        %v1046 = vrot.slane %v1045, 2
        %v1047 = vadd.f32 %v1045, %v1046
        %v1048 = vrot.slane %v1047, 1
        %v1049 = vadd.f32 %v1047, %v1048
        %v1050 = vsel %vm370, %v1030, 0.0
        %v1051 = vrot.slane %v1050, 4
        %v1052 = vadd.f32 %v1050, %v1051
        %v1053 = vrot.slane %v1052, 2
        %v1054 = vadd.f32 %v1052, %v1053
        %v1055 = vrot.slane %v1054, 1
        %v1056 = vadd.f32 %v1054, %v1055
        %v1057 = vsel %vm370, %v1031, 0.0
        %v1058 = vrot.slane %v1057, 4
        %v1059 = vadd.f32 %v1057, %v1058
        %v1060 = vrot.slane %v1059, 2
        %v1061 = vadd.f32 %v1059, %v1060
        %v1062 = vrot.slane %v1061, 1
        %v1063 = vadd.f32 %v1061, %v1062
        %v1064 = vsel %vm370, %v1032, 0.0
        %v1065 = vrot.slane %v1064, 4
        %v1066 = vadd.f32 %v1064, %v1065
        %v1067 = vrot.slane %v1066, 2
        %v1068 = vadd.f32 %v1066, %v1067
        %v1069 = vrot.slane %v1068, 1
        %v1070 = vadd.f32 %v1068, %v1069
        %v1071 = vsel %vm370, %v1033, 0.0
        %v1072 = vrot.slane %v1071, 4
        %v1073 = vadd.f32 %v1071, %v1072
        %v1074 = vrot.slane %v1073, 2
        %v1075 = vadd.f32 %v1073, %v1074
        %v1076 = vrot.slane %v1075, 1
        %v1077 = vadd.f32 %v1075, %v1076
        %v1078 = vsel %vm370, %v1034, 0.0
        %v1079 = vrot.slane %v1078, 4
        %v1080 = vadd.f32 %v1078, %v1079
        %v1081 = vrot.slane %v1080, 2
        %v1082 = vadd.f32 %v1080, %v1081
        %v1083 = vrot.slane %v1082, 1
        %v1084 = vadd.f32 %v1082, %v1083
        %v1085 = vsel %vm370, %v1035, 0.0
        %v1086 = vrot.slane %v1085, 4
        %v1087 = vadd.f32 %v1085, %v1086
        %v1088 = vrot.slane %v1087, 2
        %v1089 = vadd.f32 %v1087, %v1088
        %v1090 = vrot.slane %v1089, 1
        %v1091 = vadd.f32 %v1089, %v1090
        %v1092 = vld [vmem:[%s6] sm:$0xff]
        %v1093 = vld [vmem:[%s6 + $0x8] sm:$0xff]
        %v1094 = vld [vmem:[%s6 + $0x10] sm:$0xff]
        %v1095 = vld [vmem:[%s6 + $0x18] sm:$0xff]
        %v1096 = vld [vmem:[%s7] sm:$0x1]
        %v1098 = vlaneseq
        %v1099 = vshrl.u32 %v1098, 7
        %v1100 = vsub.s32 0, %v1099
        %v1101 = vrot.slane %v1096, %v1100
        %v1111 = vsel %vm779, %v1049, %v1042
        %v1112 = vsel %vm781, %v1056, %v1111
        %v1113 = vsel %vm783, %v1063, %v1112
        %v1114 = vsel %vm785, %v1070, %v1113
        %v1115 = vsel %vm787, %v1077, %v1114
        %v1116 = vsel %vm789, %v1084, %v1115
        %v1117 = vsel %vm791, %v1091, %v1116
        %v1118 = vsel %vm370, %v1117, 0
        %1120 = vmatprep.subr.mxu0 0.0
        %1121 = vmatpush1.msra.mxu0 0.0
        %1122 = vmatprep.subr.mxu0 0.0
        %1123 = vmatpush1.msra.mxu0 0.0
        %1124 = vmatprep.subr.mxu0 0.0
        %1125 = vmatpush1.msra.mxu0 0.0
        %1126 = vmatprep.subr.mxu0 0.0
        %1127 = vmatpush1.msra.mxu0 0.0
        %1128 = vmatprep.subr.mxu0 0.0
        %1129 = vmatpush1.msra.mxu0 0.0
        %1130 = vmatprep.subr.mxu0 0.0
        %1131 = vmatpush1.msra.mxu0 0.0
        %1132 = vmatprep.subr.mxu0 0.0
        %1133 = vmatpush1.msra.mxu0 0.0
        %1134 = vmatprep.subr.mxu0 0.0
        %1135 = vmatpush1.msra.mxu0 0.0
        %1136 = vmatprep.subr.mxu0 0.0
        %1137 = vmatpush1.msra.mxu0 0.0
        %1138 = vmatprep.subr.mxu0 0.0
        %1139 = vmatpush1.msra.mxu0 0.0
        %1140 = vmatprep.subr.mxu0 0.0
        %1141 = vmatpush1.msra.mxu0 0.0
        %1142 = vmatprep.subr.mxu0 0.0
        %1143 = vmatpush1.msra.mxu0 0.0
        %1144 = vmatprep.subr.mxu0 0.0
        %1145 = vmatpush1.msra.mxu0 %v1095
        %1146 = vmatprep.subr.mxu0 0.0
        %1147 = vmatpush1.msra.mxu0 %v1094
        %1148 = vmatprep.subr.mxu0 0.0
        %1149 = vmatpush1.msra.mxu0 %v1093
        %1150 = vmatprep.subr.mxu0 0.0
        %1151 = vmatpush1.msra.mxu0 %v1092
        %1152 = vmatprep.subr.mxu0 0.0
        %1153 = vmatpush2.msra.mxu0 0.0
        %1154 = vmatprep.subr.mxu0 0.0
        %1155 = vmatpush2.msra.mxu0 0.0
        %1156 = vmatprep.subr.mxu0 0.0
        %1157 = vmatpush2.msra.mxu0 0.0
        %1158 = vmatprep.subr.mxu0 0.0
        %1159 = vmatpush2.msra.mxu0 0.0
        %1160 = vmatprep.subr.mxu0 0.0
        %1161 = vmatpush2.msra.mxu0 0.0
        %1162 = vmatprep.subr.mxu0 0.0
        %1163 = vmatpush2.msra.mxu0 0.0
        %1164 = vmatprep.subr.mxu0 0.0
        %1165 = vmatpush2.msra.mxu0 0.0
        %1166 = vmatprep.subr.mxu0 0.0
        %1167 = vmatpush2.msra.mxu0 0.0
        %1168 = vmatprep.subr.mxu0 0.0
        %1169 = vmatpush2.msra.mxu0 0.0
        %1170 = vmatprep.subr.mxu0 0.0
        %1171 = vmatpush2.msra.mxu0 0.0
        %1172 = vmatprep.subr.mxu0 0.0
        %1173 = vmatpush2.msra.mxu0 0.0
        %1174 = vmatprep.subr.mxu0 0.0
        %1175 = vmatpush2.msra.mxu0 0.0
        %1176 = vmatprep.subr.mxu0 0.0
        %1177 = vmatpush2.msra.mxu0 0.0
        %1178 = vmatprep.subr.mxu0 0.0
        %1179 = vmatpush2.msra.mxu0 0.0
        %1180 = vmatprep.subr.mxu0 0.0
        %1181 = vmatpush2.msra.mxu0 0.0
        %1182 = vmatprep.subr.mxu0 0.0
        %1183 = vmatpush2.msra.mxu0 0.0
        %1184 = vmatprep.mubr.f32.mxu0 0.0
        %1185 = vmatmul.mubr.f32.gmra.mxu0 %v1118
        %v1186 = vpop.f32.mrf.mxu0
        %v1187 = vadd.f32 %v1101, %v1186
        %v1188 = vpop.f32.mrf.mxu0
        %1189 = vdwg.mxu0
        %v1190 = vmax.f32 %v1187, 0.0
        %vm1191 = vcmask 130048
        %1192 = vst.msk [vmem:[%s351] sm:$0xff] %vm1191, %v1190
        %s1193 = sand.u32 %s212, 1
        %s1194 = scalar_lea.sflag [#allocation4], %s1193
        %s1195 = sand.u32 %s212, 1
        %s1196 = smul.addr %s1195, 8
        %s1197 = scalar_lea.vmem [#allocation7], %s1196
        // Predicated region
        $region61: #{tpu_custom_call.1} parent=51 // pred_check
          %p1198 = pneg %p222
        $region62: #{tpu_custom_call.1} parent=51 // pred_check_branch
          %1200 = sbr.rel (%p1198) target = $region64
        $region63: #{tpu_custom_call.1} parent=51 // pred_region
          %s1202 = ssub.s32 128, 128
          %1203 = vsyncadd %s1194, %s1202
          %s1204 = smul.addr %s26, 128
          %s1205 = scalar_lea.hbm %s8, %s1204
          %s1207 = sshll.u32 %s1197, 4
          %s1208 = int_to_ptr.vmem [resolvable:$true] %s1207
          %1210 = dma.vmem_to_hbm [thread:$0]  %s1208, 128, %s1205, %s1194
        $region64: #{tpu_custom_call.1} parent=51 // pred_fallthru
          _
      $region52: #{tpu_custom_call.1} parent=5 // pred_fallthru
        _
      %p1211 = scmp.le.s32.totalorder 2, %s21
      // Predicated region
      $region65: #{tpu_custom_call.1} parent=5 // pred_check
        %p1212 = pneg %p1211
      $region66: #{tpu_custom_call.1} parent=5 // pred_check_branch
        %1214 = sbr.rel (%p1212) target = $region68
      $region67: #{tpu_custom_call.1} parent=5 // pred_region
        %s1215 = ssub.s32 %s21, 2
        // Predicated region
        $region69: #{tpu_custom_call.1} parent=67 // pred_check
          %p1216 = pneg %p228
        $region70: #{tpu_custom_call.1} parent=67 // pred_check_branch
          %1218 = sbr.rel (%p1216) target = $region72
        $region71: #{tpu_custom_call.1} parent=67 // pred_region
          %s1219 = sand.u32 %s213, 1
          %s1220 = scalar_lea.sflag [#allocation4], %s1219
          %s1221 = sand.u32 %s213, 1
          %s1222 = smul.addr %s1221, 8
          %s1223 = scalar_lea.vmem [#allocation7], %s1222
          %1224 = dma.done %s1220, 128
        $region72: #{tpu_custom_call.1} parent=67 // pred_fallthru
          _
      $region68: #{tpu_custom_call.1} parent=5 // pred_fallthru
        _
    $region6: #{tpu_custom_call.1} parent=1 // loop_footer
      %s25 = sadd.s32 1, %s21
    $region7: #{tpu_custom_call.1} parent=1 // loop_footer_branch
      %20 = sbr.rel target = $region3
    $region8: #{tpu_custom_call.1} parent=1 // loop_exit
      _
    %1225 = vsyncpa [#allocation3], 1
    %s1226 = scalar_lea.sflag [#allocation3], 1
    %1227 = vsyncpa %s1226, 1
    %1228 = vsyncpa [#allocation6], 1
    %1229 = vsyncpa [#allocation4], 1
    %s1230 = scalar_lea.sflag [#allocation4], 1
    %1231 = vsyncpa %s1230, 1

</llo_original>
